<compile_context>
chip_gen: v7x
topology: tpu7x:2x2x1
jax: 0.10.0
libtpu: 0.0.40
codegen_flags: <defaults>
</compile_context>

<pallas_src>
import jax
import jax.numpy as jnp
from jax.experimental import pallas as pl
from jax.experimental.pallas import tpu as pltpu


def _round_up(x, m):
    return (x + m - 1) // m * m


def _residual_linear_kernel(x_ref, w_ref, b_ref, o_ref, acc_ref):
    j = pl.program_id(1)
    k = pl.program_id(2)

    @pl.when(k == 0)
    def _init():
        acc_ref[...] = jnp.zeros_like(acc_ref)

    # MXU: operands arrive already in the MXU dtype (bf16 by default), so no
    # per-k-step VPU cast of a full tile; accumulation is f32.
    acc_ref[...] += jnp.dot(x_ref[...], w_ref[...],
                            preferred_element_type=jnp.float32)

    # Residual fold: tn == tk and N/K share the same padded extent, so the
    # LHS block at (i, k == j) is exactly the residual tile of output (i, j).
    # This removes the separate residual input stream entirely.
    @pl.when(k == j)
    def _residual():
        acc_ref[...] += x_ref[...].astype(jnp.float32)

    @pl.when(k == pl.num_programs(2) - 1)
    def _finalize():
        # Bias (kept in f32) added exactly once per output tile (epilogue).
        o_ref[...] = (acc_ref[...] + b_ref[...]).astype(o_ref.dtype)


def residual_linear(x, w, b, *, tm=512, th=512,
                    operand_dtype=jnp.bfloat16, out_dtype=None,
                    use_pallas=None):
    """out = (x @ w + b) + x  == Residual(Linear).forward(x), fused on TPU.

    x: [M, H], w: [H, H] (PyTorch weight.T), b: [H].
    """
    M, H = x.shape
    assert w.shape == (H, H) and b.shape == (H,)
    out_dtype = out_dtype if out_dtype is not None else x.dtype

    # Tiny problems: padding H up to 128 makes >75% of the MXU work zeros and
    # the fixed pallas_call/pad overhead dominates -> plain XLA wins.
    if use_pallas is None:
        use_pallas = (H >= 128) and (M * H >= 128 * 128)
    if not use_pallas:
        return (jnp.dot(x, w) + b + x).astype(out_dtype)

    # Tile clamping: lane dims (N, K) 128-aligned, sublane dim (M) 8-aligned.
    # tn == tk is required for the in-kernel residual fold and lets x be
    # padded exactly once for both its LHS and residual roles.
    tn = tk = min(_round_up(th, 128), _round_up(H, 128))
    tm = min(_round_up(tm, 8), _round_up(M, 8))
    Hp = _round_up(H, tn)
    Mp = _round_up(M, tm)

    # Megacore guard (v7x has 2 TCs sharing the "parallel" grid axes): ensure
    # the parallel extent product is >= 2 whenever the problem allows it.
    if (Mp // tm) * (Hp // tn) < 2 and Mp >= 16 and tm > 8:
        tm = max(8, _round_up(Mp // 2, 8))
        Mp = _round_up(M, tm)

    # Pad once and cast the MXU operands OUTSIDE the kernel.  Zero padding
    # leaves the [:M, :H] window unchanged.  NOTE: in a real model the static
    # weight should be padded/cast once at parameter-init time, not per call.
    xp = jnp.pad(x, ((0, Mp - M), (0, Hp - H))).astype(operand_dtype)
    wp = jnp.pad(w, ((0, Hp - H), (0, Hp - H))).astype(operand_dtype)
    bp = jnp.pad(b, (0, Hp - H)).astype(jnp.float32).reshape(1, Hp)

    grid = (Mp // tm, Hp // tn, Hp // tk)

    op_bytes = jnp.dtype(operand_dtype).itemsize
    out_bytes = jnp.dtype(out_dtype).itemsize
    # Double-buffered inputs/output + f32 accumulator scratch.
    vmem_need = (2 * (tm * tk + tk * tn) * op_bytes
                 + 2 * tm * tn * out_bytes + 2 * tn * 4
                 + tm * tn * 4)
    # Default scoped VMEM is 16/32 MiB; physical is 128 MiB (v5e/v6e) but only
    # 64 MiB per TC on v7x -> cap the explicit request at 64 MiB.
    vmem_limit = int(min(64 << 20, max(32 << 20, vmem_need * 5 // 4)))

    out = pl.pallas_call(
        _residual_linear_kernel,
        out_shape=jax.ShapeDtypeStruct((Mp, Hp), out_dtype),
        grid=grid,
        in_specs=[
            pl.BlockSpec((tm, tk), lambda i, j, k: (i, k)),   # x (LHS + residual)
            pl.BlockSpec((tk, tn), lambda i, j, k: (k, j)),   # w
            pl.BlockSpec((1, tn), lambda i, j, k: (0, j)),    # bias (f32)
        ],
        out_specs=pl.BlockSpec((tm, tn), lambda i, j, k: (i, j)),
        scratch_shapes=[pltpu.VMEM((tm, tn), jnp.float32)],
        compiler_params=pltpu.CompilerParams(
            dimension_semantics=("parallel", "parallel", "arbitrary"),
            vmem_limit_bytes=vmem_limit),
        cost_estimate=pl.CostEstimate(
            flops=2 * Mp * Hp * Hp,
            transcendentals=0,
            bytes_accessed=(Mp * Hp * op_bytes * (Hp // tn)     # x, re-read per j
                            + Hp * Hp * op_bytes * (Mp // tm)   # w, re-read per i
                            + Hp * 4 * (Mp // tm)               # bias
                            + Mp * Hp * out_bytes)),            # output
    )(xp, wp, bp)

    return out[:M, :H]


if __name__ == "__main__":
    batch, seq, hidden = 2, 8, 32

    key = jax.random.PRNGKey(0)
    kx, kw, kb = jax.random.split(key, 3)

    # Deterministic "parameters" for the wrapped fn (Linear hidden -> hidden).
    x = jax.random.normal(kx, (batch, seq, hidden), dtype=jnp.float32)
    w = jax.random.normal(kw, (hidden, hidden), dtype=jnp.float32) * 0.05
    b = jax.random.normal(kb, (hidden,), dtype=jnp.float32) * 0.05

    x2d = x.reshape(batch * seq, hidden)          # glue reshape in plain JAX
    # Force the Pallas path even at this tiny demo size (auto-dispatch would
    # otherwise hand such small shapes to plain XLA).
    out = residual_linear(x2d, w, b, use_pallas=True).reshape(batch, seq, hidden)
    jax.block_until_ready(out)

    # Pure-f32 reference: Residual(Linear).forward(x) == x @ w + b + x.
    # Kernel uses bf16 MXU operands / bf16 residual (f32 accumulation), so a
    # bf16-level tolerance is used.
    ref = jnp.einsum("bsh,hk->bsk", x, w) + b + x
    assert jnp.allclose(out, ref, atol=2e-2, rtol=2e-2), "mismatch vs f32 reference"

    # Multi-tile grid check (grid = (2, 3, 3)): exercises the k-accumulator
    # path and the k==j residual fold.  Reference mirrors kernel numerics
    # (bf16 operands, f32 accumulation, bf16-rounded residual).
    M2, H2 = 256, 384
    k1, k2, k3 = jax.random.split(jax.random.PRNGKey(1), 3)
    x2 = jax.random.normal(k1, (M2, H2), dtype=jnp.float32)
    w2 = jax.random.normal(k2, (H2, H2), dtype=jnp.float32) * 0.02
    b2 = jax.random.normal(k3, (H2,), dtype=jnp.float32) * 0.02
    out2 = residual_linear(x2, w2, b2, tm=128, th=128)
    jax.block_until_ready(out2)
    xb = x2.astype(jnp.bfloat16)
    ref2 = (jnp.dot(xb, w2.astype(jnp.bfloat16),
                    preferred_element_type=jnp.float32)
            + b2 + xb.astype(jnp.float32))
    assert jnp.allclose(out2, ref2, atol=1e-3, rtol=1e-3), "tiled-grid mismatch"

    print("KERNEL_OK")
</pallas_src>

<mosaic_0001>
module attributes {stable_mosaic.version = 11 : i64} {
  func.func @_residual_linear_kernel(%arg0: i32, %arg1: i32, %arg2: i32, %arg3: memref<8x128xbf16, #tpu.memory_space<vmem>>, %arg4: memref<128x128xbf16, #tpu.memory_space<vmem>>, %arg5: memref<1x128xf32, #tpu.memory_space<vmem>>, %arg6: memref<8x128xf32, #tpu.memory_space<vmem>>, %arg7: memref<8x128xf32, #tpu.memory_space<vmem>>) attributes {dimension_semantics = [#tpu.dimension_semantics<parallel>, #tpu.dimension_semantics<parallel>, #tpu.dimension_semantics<arbitrary>], iteration_bounds = array<i64: 2, 1, 1>, scalar_prefetch = 0 : i64, scratch_operands = 1 : i64, tpu.core_type = #tpu.core_type<tc>, window_params = [{transform_indices = @transform_0, window_bounds = array<i64: 8, 128>}, {transform_indices = @transform_1, window_bounds = array<i64: 128, 128>}, {transform_indices = @transform_2, window_bounds = array<i64: 1, 128>}, {transform_indices = @transform_3, window_bounds = array<i64: 8, 128>}]} {
    %c0_i32 = arith.constant 0 : i32
    %0 = arith.cmpi eq, %arg2, %c0_i32 : i32
    %1 = arith.extui %0 : i1 to i32
    %c0_i32_0 = arith.constant 0 : i32
    %2 = arith.cmpi ne, %1, %c0_i32_0 : i32
    scf.if %2 {
      %cst_11 = arith.constant 0.000000e+00 : f32
      %15 = vector.broadcast %cst_11 : f32 to vector<8x128xf32>
      %c0_12 = arith.constant 0 : index
      %c0_13 = arith.constant 0 : index
      %16 = vector.load %arg7[%c0_12, %c0_13] : memref<8x128xf32, #tpu.memory_space<vmem>>, vector<8x128xf32>
      tpu.vector_store %arg7[%c0_12, %c0_13], %15 {strides = array<i32>} : memref<8x128xf32, #tpu.memory_space<vmem>>, vector<8x128xf32>,
    } else {
    }
    %c0 = arith.constant 0 : index
    %c0_1 = arith.constant 0 : index
    %3 = vector.load %arg7[%c0, %c0_1] : memref<8x128xf32, #tpu.memory_space<vmem>>, vector<8x128xf32>
    %c0_2 = arith.constant 0 : index
    %c0_3 = arith.constant 0 : index
    %4 = vector.load %arg3[%c0_2, %c0_3] : memref<8x128xbf16, #tpu.memory_space<vmem>>, vector<8x128xbf16>
    %c0_4 = arith.constant 0 : index
    %c0_5 = arith.constant 0 : index
    %5 = vector.load %arg4[%c0_4, %c0_5] : memref<128x128xbf16, #tpu.memory_space<vmem>>, vector<128x128xbf16>
    %cst = arith.constant dense<0.000000e+00> : vector<8x128xf32>
    %6 = tpu.matmul %4, %5, %cst {dimension_numbers = #tpu.dot_dimension_numbers<[1], [0], [0], [1], [0, 0, 1, 1], [], []>} : vector<8x128xbf16>, vector<128x128xbf16>, vector<8x128xf32> -> vector<8x128xf32>
    %7 = arith.addf %3, %6 : vector<8x128xf32>
    %c0_6 = arith.constant 0 : index
    %c0_7 = arith.constant 0 : index
    %8 = vector.load %arg7[%c0_6, %c0_7] : memref<8x128xf32, #tpu.memory_space<vmem>>, vector<8x128xf32>
    tpu.vector_store %arg7[%c0_6, %c0_7], %7 {strides = array<i32>} : memref<8x128xf32, #tpu.memory_space<vmem>>, vector<8x128xf32>,
    %9 = arith.cmpi eq, %arg2, %arg1 : i32
    %10 = arith.extui %9 : i1 to i32
    %c0_i32_8 = arith.constant 0 : i32
    %11 = arith.cmpi ne, %10, %c0_i32_8 : i32
    scf.if %11 {
      %c0_11 = arith.constant 0 : index
      %c0_12 = arith.constant 0 : index
      %15 = vector.load %arg7[%c0_11, %c0_12] : memref<8x128xf32, #tpu.memory_space<vmem>>, vector<8x128xf32>
      %c0_13 = arith.constant 0 : index
      %c0_14 = arith.constant 0 : index
      %16 = vector.load %arg3[%c0_13, %c0_14] : memref<8x128xbf16, #tpu.memory_space<vmem>>, vector<8x128xbf16>
      %17 = arith.extf %16 : vector<8x128xbf16> to vector<8x128xf32>
      %18 = arith.addf %15, %17 : vector<8x128xf32>
      %c0_15 = arith.constant 0 : index
      %c0_16 = arith.constant 0 : index
      %19 = vector.load %arg7[%c0_15, %c0_16] : memref<8x128xf32, #tpu.memory_space<vmem>>, vector<8x128xf32>
      tpu.vector_store %arg7[%c0_15, %c0_16], %18 {strides = array<i32>} : memref<8x128xf32, #tpu.memory_space<vmem>>, vector<8x128xf32>,
    } else {
    }
    %c0_i32_9 = arith.constant 0 : i32
    %12 = arith.cmpi eq, %arg2, %c0_i32_9 : i32
    %13 = arith.extui %12 : i1 to i32
    %c0_i32_10 = arith.constant 0 : i32
    %14 = arith.cmpi ne, %13, %c0_i32_10 : i32
    scf.if %14 {
      %c0_11 = arith.constant 0 : index
      %c0_12 = arith.constant 0 : index
      %15 = vector.load %arg7[%c0_11, %c0_12] : memref<8x128xf32, #tpu.memory_space<vmem>>, vector<8x128xf32>
      %c0_13 = arith.constant 0 : index
      %c0_14 = arith.constant 0 : index
      %16 = vector.load %arg5[%c0_13, %c0_14] : memref<1x128xf32, #tpu.memory_space<vmem>>, vector<1x128xf32>
      %17 = vector.broadcast %16 : vector<1x128xf32> to vector<8x128xf32>
      %18 = arith.addf %15, %17 : vector<8x128xf32>
      %c0_15 = arith.constant 0 : index
      %c0_16 = arith.constant 0 : index
      %19 = vector.load %arg6[%c0_15, %c0_16] : memref<8x128xf32, #tpu.memory_space<vmem>>, vector<8x128xf32>
      tpu.vector_store %arg6[%c0_15, %c0_16], %18 {strides = array<i32>} : memref<8x128xf32, #tpu.memory_space<vmem>>, vector<8x128xf32>,
    } else {
    }
    return
  }
  func.func @transform_0(%arg0: i32, %arg1: i32, %arg2: i32) -> (i32, i32) {
    %c0_i32 = arith.constant 0 : i32
    return %arg0, %arg2 : i32, i32
  }
  func.func @transform_1(%arg0: i32, %arg1: i32, %arg2: i32) -> (i32, i32) {
    %c0_i32 = arith.constant 0 : i32
    return %arg2, %arg1 : i32, i32
  }
  func.func @transform_2(%arg0: i32, %arg1: i32, %arg2: i32) -> (i32, i32) {
    %c0_i32 = arith.constant 0 : i32
    %c0_i32_0 = arith.constant 0 : i32
    return %c0_i32, %arg1 : i32, i32
  }
  func.func @transform_3(%arg0: i32, %arg1: i32, %arg2: i32) -> (i32, i32) {
    %c0_i32 = arith.constant 0 : i32
    return %arg0, %arg1 : i32, i32
  }
}

</mosaic_0001>

<llo_original>
// kernel: tpu_custom_call.1
$region0: #{tpu_custom_call.1}
  #allocation0 [shape = 'u32[]', space=smem, size = 0x4, offset = 0x4, fixed_abs, tag = 'smem constant byte address 0x4 - core index']
  #allocation1 [shape = 'u32[144,128]{1,0:T(1,128)}', space=vmem, size = 0x12000, scoped, tag = 'internal scratch']
  #allocation2 [shape = 'f32[8,128]{1,0:T(8,128)}', space=vmem, size = 0x1000, scoped, tag = 'scratch operand']
  %s0 = inlined_call_operand.hbm [shape: bf16[16,128], index: 0, kind: input, shape index: {}]
  %s1 = inlined_call_operand.hbm [shape: bf16[128,128], index: 1, kind: input, shape index: {}]
  %s2 = inlined_call_operand.vmem [shape: f32[1,128], index: 2, kind: input, shape index: {}]
  %s3 = inlined_call_operand.hbm [shape: f32[16,128], index: 3, kind: output, shape index: {}]
  %s4 = sld [smem:[#allocation0]]
  $region65: #{tpu_custom_call.1} parent=0
    _
  %s6 = ssub.s32 1, %s4
  %s7 = scalar_select 0, %s6, %s4
  $region1: #{tpu_custom_call.1} parent=0
    #allocation3 [shape = 'u8[4096]{0}', space=vmem, size = 0x1000, scoped, tag = 'input window, operand 0']
    #allocation4 [shape = 's32[2]{0}', space=sflag, size = 0x8, scoped, tag = 'scoped memory for tpu_custom_call.1']
    #allocation5 [shape = 's32[2]{0}', space=sflag, size = 0x8, scoped, tag = 'scoped memory for tpu_custom_call.1']
    #allocation6 [shape = 'u8[32768]{0}', space=vmem, size = 0x8000, scoped, tag = 'input window, operand 1, single buffered']
    #allocation7 [shape = 's32[1]{0}', space=sflag, size = 0x4, scoped, tag = 'scoped memory for tpu_custom_call.1']
    #allocation8 [shape = 'u8[8192]{0}', space=vmem, size = 0x2000, scoped, tag = 'output window, operand 0']
    %8 = vsyncpa [#allocation4], 0
    %s9 = scalar_lea.sflag [#allocation4], 1
    %10 = vsyncpa %s9, 0
    %11 = vsyncpa [#allocation7], 0
    %12 = vsyncpa [#allocation5], 0
    %s13 = scalar_lea.sflag [#allocation5], 1
    %14 = vsyncpa %s13, 0
    loop: start=0, step=1, limit=4
    $region2: #{tpu_custom_call.1} parent=1 // loop_pre_header
      _
    $region3: #{tpu_custom_call.1} parent=1 // loop_header
      %s16 = sphi 0, %s20
      %p17 = scmp.ge.s32.totalorder %s16, 4
      %s23 = sphi 0, %s42
      %s24 = sphi 0, %s38
      %s25 = sphi 0, %s34
      %s26 = sphi 0, %s23
      %s27 = sphi 0, %s24
      %s28 = sphi 0, %s25
      %s29 = sphi 0, %s26
      %s30 = sphi 0, %s27
      %s31 = sphi 0, %s28
      %s47 = sphi 0, %s49
      %s50 = sphi 0, %s47
      %s51 = sphi 0, %s50
      %s67 = sphi 0, %s51
      %s75 = sphi 0, %s77
      %s78 = sphi 0, %s75
      %s79 = sphi 0, %s78
      %s95 = sphi 0, %s79
      %s101 = sphi 0, %s103
      %s104 = sphi 0, %s101
      %s105 = sphi 0, %s104
      %s121 = sphi 0, %s105
      %s129 = sphi 0, %s131
      %s132 = sphi 0, %s129
      %s133 = sphi 0, %s132
      %s149 = sphi 0, %s133
    $region4: #{tpu_custom_call.1} parent=1 // loop_header_branch
      %19 = sbr.rel (%p17) target = $region8
    $region5: #{tpu_custom_call.1} parent=1 // loop_body
      %s21 = ssub.s32 %s16, 1
      %s22 = ssub.s32 %s16, 2
      %s32 = sadd.s32 1, %s25
      %p33 = scmp.ge.s32.totalorder %s32, 1
      %s34 = scalar_select %p33, 0, %s32
      %s35 = sadd.s32 1, %s24
      %s36 = scalar_select %p33, %s35, %s24
      %p37 = scmp.ge.s32.totalorder %s36, 1
      %s38 = scalar_select %p37, 0, %s36
      %s39 = sadd.s32 1, %s23
      %s40 = scalar_select %p37, %s39, %s23
      %p41 = scmp.ge.s32.totalorder %s40, 2
      %s42 = scalar_select %p41, 0, %s40
      %s43 = ssub.s32 %s23, %s42
      %s44 = ssub.s32 %s25, %s34
      %s45 = sor.u32 %s43, %s44
      %p46 = scmp.eq.s32.totalorder %s45, 0
      %s48 = sadd.s32 %s47, 1
      %s49 = scalar_select %p46, %s47, %s48
      %p52 = pneg %p46
      %p53 = scmp.eq.s32.totalorder %s16, 1
      %p54 = por %p52, %p53
      %p55 = scmp.ne.s32.totalorder %s47, %s50
      %p56 = scmp.eq.s32.totalorder %s16, 0
      %p57 = por %p55, %p56
      %p58 = scmp.ne.s32.totalorder %s47, %s50
      %p59 = scmp.eq.s32.totalorder %s21, 1
      %p60 = por %p58, %p59
      %p61 = scmp.ne.s32.totalorder %s50, %s51
      %p62 = scmp.eq.s32.totalorder %s21, 0
      %p63 = por %p61, %p62
      %p64 = scmp.ne.s32.totalorder %s50, %s51
      %p65 = scmp.eq.s32.totalorder %s22, 1
      %p66 = por %p64, %p65
      %p68 = scmp.ne.s32.totalorder %s51, %s67
      %p69 = scmp.eq.s32.totalorder %s22, 0
      %p70 = por %p68, %p69
      %s71 = ssub.s32 %s25, %s34
      %s72 = ssub.s32 %s24, %s38
      %s73 = sor.u32 %s71, %s72
      %p74 = scmp.eq.s32.totalorder %s73, 0
      %s76 = sadd.s32 %s75, 1
      %s77 = scalar_select %p74, %s75, %s76
      %p80 = pneg %p74
      %p81 = scmp.eq.s32.totalorder %s16, 1
      %p82 = por %p80, %p81
      %p83 = scmp.ne.s32.totalorder %s75, %s78
      %p84 = scmp.eq.s32.totalorder %s16, 0
      %p85 = por %p83, %p84
      %p86 = scmp.ne.s32.totalorder %s75, %s78
      %p87 = scmp.eq.s32.totalorder %s21, 1
      %p88 = por %p86, %p87
      %p89 = scmp.ne.s32.totalorder %s78, %s79
      %p90 = scmp.eq.s32.totalorder %s21, 0
      %p91 = por %p89, %p90
      %p92 = scmp.ne.s32.totalorder %s78, %s79
      %p93 = scmp.eq.s32.totalorder %s22, 1
      %p94 = por %p92, %p93
      %p96 = scmp.ne.s32.totalorder %s79, %s95
      %p97 = scmp.eq.s32.totalorder %s22, 0
      %p98 = por %p96, %p97
      %s99 = ssub.s32 %s24, %s38
      %p100 = scmp.eq.s32.totalorder %s99, 0
      %s102 = sadd.s32 %s101, 1
      %s103 = scalar_select %p100, %s101, %s102
      %p106 = pneg %p100
      %p107 = scmp.eq.s32.totalorder %s16, 1
      %p108 = por %p106, %p107
      %p109 = scmp.ne.s32.totalorder %s101, %s104
      %p110 = scmp.eq.s32.totalorder %s16, 0
      %p111 = por %p109, %p110
      %p112 = scmp.ne.s32.totalorder %s101, %s104
      %p113 = scmp.eq.s32.totalorder %s21, 1
      %p114 = por %p112, %p113
      %p115 = scmp.ne.s32.totalorder %s104, %s105
      %p116 = scmp.eq.s32.totalorder %s21, 0
      %p117 = por %p115, %p116
      %p118 = scmp.ne.s32.totalorder %s104, %s105
      %p119 = scmp.eq.s32.totalorder %s22, 1
      %p120 = por %p118, %p119
      %p122 = scmp.ne.s32.totalorder %s105, %s121
      %p123 = scmp.eq.s32.totalorder %s22, 0
      %p124 = por %p122, %p123
      %s125 = ssub.s32 %s23, %s42
      %s126 = ssub.s32 %s24, %s38
      %s127 = sor.u32 %s125, %s126
      %p128 = scmp.eq.s32.totalorder %s127, 0
      %s130 = sadd.s32 %s129, 1
      %s131 = scalar_select %p128, %s129, %s130
      %p134 = pneg %p128
      %p135 = scmp.eq.s32.totalorder %s16, 1
      %p136 = por %p134, %p135
      %p137 = scmp.ne.s32.totalorder %s129, %s132
      %p138 = scmp.eq.s32.totalorder %s16, 0
      %p139 = por %p137, %p138
      %p140 = scmp.ne.s32.totalorder %s129, %s132
      %p141 = scmp.eq.s32.totalorder %s21, 1
      %p142 = por %p140, %p141
      %p143 = scmp.ne.s32.totalorder %s132, %s133
      %p144 = scmp.eq.s32.totalorder %s21, 0
      %p145 = por %p143, %p144
      %p146 = scmp.ne.s32.totalorder %s132, %s133
      %p147 = scmp.eq.s32.totalorder %s22, 1
      %p148 = por %p146, %p147
      %p150 = scmp.ne.s32.totalorder %s133, %s149
      %p151 = scmp.eq.s32.totalorder %s22, 0
      %p152 = por %p150, %p151
      %p153 = scmp.le.s32.totalorder 1, %s16
      %p154 = scmp.lt.s32.totalorder %s16, 3
      %p155 = pnand %p153, %p154
      %p156 = pneg %p155
      // Predicated region
      $region9: #{tpu_custom_call.1} parent=5 // pred_check
        _
      $region10: #{tpu_custom_call.1} parent=5 // pred_check_branch
        %158 = sbr.rel (%p155) target = $region12
      $region11: #{tpu_custom_call.1} parent=5 // pred_region
        %s159 = ssub.s32 %s16, 1
        // Predicated region
        $region13: #{tpu_custom_call.1} parent=11 // pred_check
          %p160 = pneg %p91
        $region14: #{tpu_custom_call.1} parent=11 // pred_check_branch
          %162 = sbr.rel (%p160) target = $region16
        $region15: #{tpu_custom_call.1} parent=11 // pred_region
          %s163 = smul.u32 16, %s28
          %s165 = ssub.s32 1024, 1024
          %166 = vsyncadd [#allocation7], %s165
          %s167 = sadd.s32 %s27, %s163
          %s168 = smul.addr %s167, 64
          %s169 = scalar_lea.hbm %s1, %s168
          %s170 = sshll.u32 [#allocation6], 4
          %s171 = int_to_ptr.vmem [resolvable:$true] %s170
          %176 = dma.hbm_to_vmem [thread:$0]  %s169, 1024, %s171, [#allocation7], 64, 64, 4
        $region16: #{tpu_custom_call.1} parent=11 // pred_fallthru
          _
        // Predicated region
        $region17: #{tpu_custom_call.1} parent=11 // pred_check
          %p177 = pneg %p117
        $region18: #{tpu_custom_call.1} parent=11 // pred_check_branch
          %179 = sbr.rel (%p177) target = $region20
        $region19: #{tpu_custom_call.1} parent=11 // pred_region
          %p180 = scmp.lt.s32.totalorder %s27, 0
          %s181 = scalar_select %p180, %s27, 0
          %s182 = scalar_lea.vmem %s2, %s181
        $region20: #{tpu_custom_call.1} parent=11 // pred_fallthru
          _
      $region12: #{tpu_custom_call.1} parent=5 // pred_fallthru
        _
      %p183 = scmp.lt.s32.totalorder %s16, 2
      // Predicated region
      $region21: #{tpu_custom_call.1} parent=5 // pred_check
        %p184 = pneg %p183
      $region22: #{tpu_custom_call.1} parent=5 // pred_check_branch
        %186 = sbr.rel (%p184) target = $region24
      $region23: #{tpu_custom_call.1} parent=5 // pred_region
        // Predicated region
        $region25: #{tpu_custom_call.1} parent=23 // pred_check
          %p187 = pneg %p57
        $region26: #{tpu_custom_call.1} parent=23 // pred_check_branch
          %189 = sbr.rel (%p187) target = $region28
        $region27: #{tpu_custom_call.1} parent=23 // pred_region
          %s190 = sand.u32 %s47, 1
          %s191 = scalar_lea.sflag [#allocation4], %s190
          %s192 = sand.u32 %s47, 1
          %s193 = smul.addr %s192, 4
          %s194 = scalar_lea.vmem [#allocation3], %s193
          %s196 = ssub.s32 64, 64
          %197 = vsyncadd %s191, %s196
          %s198 = sadd.s32 %s25, %s23
          %s199 = smul.addr %s198, 64
          %s200 = scalar_lea.hbm %s0, %s199
          %s202 = sshll.u32 %s194, 4
          %s203 = int_to_ptr.vmem [resolvable:$true] %s202
          %205 = dma.hbm_to_vmem [thread:$0]  %s200, 64, %s203, %s191
        $region28: #{tpu_custom_call.1} parent=23 // pred_fallthru
          _
      $region24: #{tpu_custom_call.1} parent=5 // pred_fallthru
        _
      %p206 = scmp.le.s32.totalorder 1, %s16
      %p207 = scmp.lt.s32.totalorder %s16, 3
      %p208 = pnand %p206, %p207
      %p209 = pneg %p208
      // Predicated region
      $region29: #{tpu_custom_call.1} parent=5 // pred_check
        _
      $region30: #{tpu_custom_call.1} parent=5 // pred_check_branch
        %211 = sbr.rel (%p208) target = $region32
      $region31: #{tpu_custom_call.1} parent=5 // pred_region
        %s212 = ssub.s32 %s16, 1
        %s213 = sand.u32 %s50, 1
        %s214 = scalar_lea.sflag [#allocation4], %s213
        %s215 = sand.u32 %s50, 1
        %s216 = smul.addr %s215, 4
        %s217 = scalar_lea.vmem [#allocation3], %s216
        // Predicated region
        $region33: #{tpu_custom_call.1} parent=31 // pred_check
          %p218 = pneg %p63
        $region34: #{tpu_custom_call.1} parent=31 // pred_check_branch
          %220 = sbr.rel (%p218) target = $region36
        $region35: #{tpu_custom_call.1} parent=31 // pred_region
          %221 = dma.done %s214, 64
        $region36: #{tpu_custom_call.1} parent=31 // pred_fallthru
          _
        // Predicated region
        $region37: #{tpu_custom_call.1} parent=31 // pred_check
          %p222 = pneg %p91
        $region38: #{tpu_custom_call.1} parent=31 // pred_check_branch
          %224 = sbr.rel (%p222) target = $region40
        $region39: #{tpu_custom_call.1} parent=31 // pred_region
          %225 = dma.done [#allocation7], 1024
        $region40: #{tpu_custom_call.1} parent=31 // pred_fallthru
          _
        %s226 = sand.u32 %s50, 1
        %s227 = scalar_lea.sflag [#allocation4], %s226
        %s228 = sand.u32 %s50, 1
        %s229 = smul.addr %s228, 4
        %s230 = scalar_lea.vmem [#allocation3], %s229
        %p231 = pneg %p63
        %p232 = pneg %p60
        %p233 = pneg %p91
        %p234 = pneg %p88
        %p235 = scmp.lt.s32.totalorder %s27, 0
        %s236 = scalar_select %p235, %s27, 0
        %s237 = scalar_lea.vmem %s2, %s236
        %p238 = pneg %p117
        %p239 = pneg %p114
        %p240 = pneg %p145
        %p241 = pneg %p142
        %s242 = sand.u32 %s132, 1
        %s243 = scalar_lea.sflag [#allocation5], %s242
        %s244 = sand.u32 %s132, 1
        %s245 = smul.addr %s244, 8
        %s246 = scalar_lea.vmem [#allocation8], %s245
        %s247 = smul.u32 16, %s28
        %p248 = scmp.lt.s32.totalorder %s27, 0
        %s249 = scalar_select %p248, %s27, 0
        %s250 = scalar_lea.vmem %s2, %s249
        %p252 = scmp.eq.s32.totalorder %s28, 0
        // Predicated region
        $region41: #{tpu_custom_call.1} parent=31 // pred_check
          %p253 = pneg %p252
        $region42: #{tpu_custom_call.1} parent=31 // pred_check_branch
          %255 = sbr.rel (%p253) target = $region44
        $region43: #{tpu_custom_call.1} parent=31 // pred_region
          %256 = vst [vmem:[#allocation2] sm:$0xff] 0.0
        $region44: #{tpu_custom_call.1} parent=31 // pred_fallthru
          _
        %v257 = vld [vmem:[#allocation2] sm:$0xff]
        %v258 = vld [vmem:[%s217] sm:$0xf]
        %v259 = vld [vmem:[#allocation6] sm:$0xf]
        %v260 = vld [vmem:[#allocation6 + $0x4] sm:$0xf]
        %v261 = vld [vmem:[#allocation6 + $0x8] sm:$0xf]
        %v262 = vld [vmem:[#allocation6 + $0xc] sm:$0xf]
        %v263 = vld [vmem:[#allocation6 + $0x10] sm:$0xf]
        %v264 = vld [vmem:[#allocation6 + $0x14] sm:$0xf]
        %v265 = vld [vmem:[#allocation6 + $0x18] sm:$0xf]
        %v266 = vld [vmem:[#allocation6 + $0x1c] sm:$0xf]
        %v267 = vld [vmem:[#allocation6 + $0x20] sm:$0xf]
        %v268 = vld [vmem:[#allocation6 + $0x24] sm:$0xf]
        %v269 = vld [vmem:[#allocation6 + $0x28] sm:$0xf]
        %v270 = vld [vmem:[#allocation6 + $0x2c] sm:$0xf]
        %v271 = vld [vmem:[#allocation6 + $0x30] sm:$0xf]
        %v272 = vld [vmem:[#allocation6 + $0x34] sm:$0xf]
        %v273 = vld [vmem:[#allocation6 + $0x38] sm:$0xf]
        %v274 = vld [vmem:[#allocation6 + $0x3c] sm:$0xf]
        %v291 = vunpack.c.l.b16 %v259
        %v292 = vunpack.c.l.b16 %v260
        %v293 = vunpack.c.l.b16 %v261
        %v294 = vunpack.c.l.b16 %v262
        %v295 = vunpack.c.l.b16 %v263
        %v296 = vunpack.c.l.b16 %v264
        %v297 = vunpack.c.l.b16 %v265
        %v298 = vunpack.c.l.b16 %v266
        %v299 = vunpack.c.l.b16 %v267
        %v300 = vunpack.c.l.b16 %v268
        %v301 = vunpack.c.l.b16 %v269
        %v302 = vunpack.c.l.b16 %v270
        %v303 = vunpack.c.l.b16 %v271
        %v304 = vunpack.c.l.b16 %v272
        %v305 = vunpack.c.l.b16 %v273
        %v306 = vunpack.c.l.b16 %v274
        %v307 = vpack.c.b16 %v292, %v291
        %v308 = vpack.c.b16 %v294, %v293
        %v309 = vpack.c.b16 %v296, %v295
        %v310 = vpack.c.b16 %v298, %v297
        %v311 = vpack.c.b16 %v300, %v299
        %v312 = vpack.c.b16 %v302, %v301
        %v313 = vpack.c.b16 %v304, %v303
        %v314 = vpack.c.b16 %v306, %v305
        %323 = vmatprep.subr.bf16.mxu0 0
        %324 = vmatpush1.bf16.msra.mxu0 %v307
        %325 = vmatprep.subr.bf16.mxu0 0
        %326 = vmatpush1.bf16.msra.mxu0 %v308
        %327 = vmatprep.subr.bf16.mxu0 0
        %328 = vmatpush1.bf16.msra.mxu0 %v309
        %329 = vmatprep.subr.bf16.mxu0 0
        %330 = vmatpush1.bf16.msra.mxu0 %v310
        %331 = vmatprep.subr.bf16.mxu0 0
        %332 = vmatpush1.bf16.msra.mxu0 %v311
        %333 = vmatprep.subr.bf16.mxu0 0
        %334 = vmatpush1.bf16.msra.mxu0 %v312
        %335 = vmatprep.subr.bf16.mxu0 0
        %336 = vmatpush1.bf16.msra.mxu0 %v313
        %337 = vmatprep.subr.bf16.mxu0 0
        %338 = vmatpush1.bf16.msra.mxu0 %v314
        %339 = vmatprep.subr.bf16.mxu0 0
        %340 = vmatpush1.bf16.msra.mxu0 0
        %341 = vmatprep.subr.bf16.mxu0 0
        %342 = vmatpush1.bf16.msra.mxu0 0
        %343 = vmatprep.subr.bf16.mxu0 0
        %344 = vmatpush1.bf16.msra.mxu0 0
        %345 = vmatprep.subr.bf16.mxu0 0
        %346 = vmatpush1.bf16.msra.mxu0 0
        %347 = vmatprep.subr.bf16.mxu0 0
        %348 = vmatpush1.bf16.msra.mxu0 0
        %349 = vmatprep.subr.bf16.mxu0 0
        %350 = vmatpush1.bf16.msra.mxu0 0
        %351 = vmatprep.subr.bf16.mxu0 0
        %352 = vmatpush1.bf16.msra.mxu0 0
        %353 = vmatprep.subr.bf16.mxu0 0
        %354 = vmatpush1.bf16.msra.mxu0 0
        %355 = vmatprep.mubr.bf16.mxu0 0
        %356 = vmatmul.mubr.bf16.gmra.mrb[0].mxu0 %v258
        %v357 = vpop.f32.mrb[0].mxu0
        %v358 = vadd.f32 0.0, %v357
        %v359 = vpop.f32.mrb[0].mxu0
        %v360 = vpop.f32.mrb[0].mxu0
        %v361 = vpop.f32.mrb[0].mxu0
        %362 = vdwg.mxu0
        %v363 = vadd.f32 %v257, %v358
        %364 = vst [vmem:[#allocation2] sm:$0xff] %v363
        %p365 = scmp.eq.s32.totalorder %s28, %s27
        // Predicated region
        $region45: #{tpu_custom_call.1} parent=31 // pred_check
          %p366 = pneg %p365
        $region46: #{tpu_custom_call.1} parent=31 // pred_check_branch
          %368 = sbr.rel (%p366) target = $region48
        $region47: #{tpu_custom_call.1} parent=31 // pred_region
          %v369 = vld [vmem:[#allocation2] sm:$0xff]
          %v370 = vld [vmem:[%s217] sm:$0xf]
          %v371 = vunpack.c.l.bf16 %v370
          %v372 = vadd.f32 %v369, %v371
          %373 = vst [vmem:[#allocation2] sm:$0xff] %v372
        $region48: #{tpu_custom_call.1} parent=31 // pred_fallthru
          _
        // Predicated region
        $region49: #{tpu_custom_call.1} parent=31 // pred_check
          %p374 = pneg %p252
        $region50: #{tpu_custom_call.1} parent=31 // pred_check_branch
          %376 = sbr.rel (%p374) target = $region52
        $region51: #{tpu_custom_call.1} parent=31 // pred_region
          %v377 = vld [vmem:[#allocation2] sm:$0xff]
          %v378 = vld [vmem:[%s250] sm:$0x1]
          %v380 = vlaneseq
          %v381 = vshrl.u32 %v380, 7
          %v382 = vsub.s32 0, %v381
          %v383 = vrot.slane %v378, %v382
          %v385 = vadd.f32 %v377, %v383
          %386 = vst [vmem:[%s246] sm:$0xff] %v385
        $region52: #{tpu_custom_call.1} parent=31 // pred_fallthru
          _
        %s387 = sand.u32 %s132, 1
        %s388 = scalar_lea.sflag [#allocation5], %s387
        %s389 = sand.u32 %s132, 1
        %s390 = smul.addr %s389, 8
        %s391 = scalar_lea.vmem [#allocation8], %s390
        // Predicated region
        $region53: #{tpu_custom_call.1} parent=31 // pred_check
          %p392 = pneg %p142
        $region54: #{tpu_custom_call.1} parent=31 // pred_check_branch
          %394 = sbr.rel (%p392) target = $region56
        $region55: #{tpu_custom_call.1} parent=31 // pred_region
          %s396 = ssub.s32 128, 128
          %397 = vsyncadd %s388, %s396
          %s398 = sadd.s32 %s27, %s26
          %s399 = smul.addr %s398, 128
          %s400 = scalar_lea.hbm %s3, %s399
          %s402 = sshll.u32 %s391, 4
          %s403 = int_to_ptr.vmem [resolvable:$true] %s402
          %405 = dma.vmem_to_hbm [thread:$0]  %s403, 128, %s400, %s388
        $region56: #{tpu_custom_call.1} parent=31 // pred_fallthru
          _
      $region32: #{tpu_custom_call.1} parent=5 // pred_fallthru
        _
      %p406 = scmp.le.s32.totalorder 2, %s16
      // Predicated region
      $region57: #{tpu_custom_call.1} parent=5 // pred_check
        %p407 = pneg %p406
      $region58: #{tpu_custom_call.1} parent=5 // pred_check_branch
        %409 = sbr.rel (%p407) target = $region60
      $region59: #{tpu_custom_call.1} parent=5 // pred_region
        %s410 = ssub.s32 %s16, 2
        // Predicated region
        $region61: #{tpu_custom_call.1} parent=59 // pred_check
          %p411 = pneg %p148
        $region62: #{tpu_custom_call.1} parent=59 // pred_check_branch
          %413 = sbr.rel (%p411) target = $region64
        $region63: #{tpu_custom_call.1} parent=59 // pred_region
          %s414 = sand.u32 %s133, 1
          %s415 = scalar_lea.sflag [#allocation5], %s414
          %s416 = sand.u32 %s133, 1
          %s417 = smul.addr %s416, 8
          %s418 = scalar_lea.vmem [#allocation8], %s417
          %419 = dma.done %s415, 128
        $region64: #{tpu_custom_call.1} parent=59 // pred_fallthru
          _
      $region60: #{tpu_custom_call.1} parent=5 // pred_fallthru
        _
    $region6: #{tpu_custom_call.1} parent=1 // loop_footer
      %s20 = sadd.s32 1, %s16
    $region7: #{tpu_custom_call.1} parent=1 // loop_footer_branch
      %15 = sbr.rel target = $region3
    $region8: #{tpu_custom_call.1} parent=1 // loop_exit
      _
    %420 = vsyncpa [#allocation4], 1
    %s421 = scalar_lea.sflag [#allocation4], 1
    %422 = vsyncpa %s421, 1
    %423 = vsyncpa [#allocation7], 1
    %424 = vsyncpa [#allocation5], 1
    %s425 = scalar_lea.sflag [#allocation5], 1
    %426 = vsyncpa %s425, 1

</llo_original>
